<compile_context>
chip_gen: v7x
topology: tpu7x:2x2x1
jax: 0.10.0
libtpu: 0.0.40
codegen_flags: <defaults>
</compile_context>

<pallas_src>
import math
import random

import jax
import jax.numpy as jnp
import numpy as np
from jax.experimental import pallas as pl
from jax.experimental.pallas import tpu as pltpu

LANE = 128
SUBLANE = 8


def _round_up(x, m):
    return ((x + m - 1) // m) * m


def _tpu_defaults():
    """Per-generation knobs: (vmem_cap_bytes, tb_max, tu_max, two_tensorcores)."""
    kind = ""
    try:
        kind = jax.devices()[0].device_kind.lower()
    except Exception:
        pass
    if "v7" in kind or "7x" in kind:
        # 64 MiB VMEM per TC, 2 TCs/chip: smaller tiles, tighter cap.
        return 40 << 20, 256, 512, True
    if "v6" in kind or "v5e" in kind or ("v5" in kind and "lite" in kind):
        # 128 MiB VMEM, 1 TC: big tiles, raise the cap well past the scoped
        # default (16 MiB on v5e / 32 MiB on v6e).
        return 100 << 20, 512, 1024, False
    # Unknown chip: conservative settings that fit every generation.
    return 48 << 20, 256, 512, False


def _largest_tile(extent, granule, max_tile):
    """Largest multiple of `granule` <= max_tile dividing round_up(extent, granule)."""
    padded = _round_up(max(extent, 1), granule)
    max_tile = max(granule, min(max_tile, padded))
    best = granule
    t = granule
    while t <= max_tile:
        if padded % t == 0:
            best = t
        t += granule
    return best, padded


def choose_tiles(b, u, *, tb_max, tu_max, prefer_two_b_blocks=False):
    """Pick (tb, tu, b_pad, u_pad) so that padding waste is zero beyond the
    (8,128) granule and (optionally) the B axis has >=2 blocks for 2-TC chips."""
    tb, b_pad = _largest_tile(b, SUBLANE, tb_max)
    if prefer_two_b_blocks and b_pad // tb < 2 and b_pad >= 2 * SUBLANE:
        tb, _ = _largest_tile(b, SUBLANE, b_pad // 2)
    tu, u_pad = _largest_tile(u, LANE, tu_max)
    return tb, tu, b_pad, u_pad


# --------------------------------------------------------------------------- #
# Kernel
# --------------------------------------------------------------------------- #
def intra_agg_kernel(mask_ref, embed_ref, self_ref, w_diff_ref, w_delta_ref,
                     inv_ref, out_ref, acc_agg_ref):
    u = pl.program_id(1)

    @pl.when(u == 0)
    def _init():
        acc_agg_ref[...] = jnp.zeros_like(acc_agg_ref)
        # self_feats @ W_diff is independent of the U reduction; write it into
        # the resident output block up front (no separate epilogue scratch) so
        # it overlaps the first mask@embed tile's DMA / MXU.
        out_ref[...] = jnp.dot(self_ref[...], w_diff_ref[...],
                               preferred_element_type=jnp.float32
                               ).astype(out_ref.dtype)

    # Partial neighbour sum: 0/1 mask tile @ embed tile (bf16 MXU path when the
    # streamed operands are bf16; f32 accumulation either way).
    acc_agg_ref[...] += jnp.dot(mask_ref[...], embed_ref[...],
                                preferred_element_type=jnp.float32)

    @pl.when(u == pl.num_programs(1) - 1)
    def _epilogue():
        # agg = (sum of neighbour rows) * (1 / num_neigh), kept in f32.
        agg = acc_agg_ref[...] * inv_ref[...]
        pre = out_ref[...].astype(jnp.float32) + jnp.dot(
            agg, w_delta_ref[...], preferred_element_type=jnp.float32)
        out_ref[...] = jnp.maximum(pre, 0.0).astype(out_ref.dtype)


# --------------------------------------------------------------------------- #
# Parameter prep (done once per layer, NOT per forward call)
# --------------------------------------------------------------------------- #
def prepare_intra_agg_weights(weight, compute_dtype=jnp.float32):
    """Split weight [2F, E] into the two halves used by the restructured
    epilogue and pad E up to a lane-dense multiple of 128."""
    two_f, e = weight.shape
    f = two_f // 2
    e_pad = _round_up(e, LANE)
    w_diff = weight[:f, :]                  # multiplies self_feats
    w_delta = weight[f:, :] - w_diff        # W_agg - W_diff (multiplies agg)
    pad = ((0, 0), (0, e_pad - e))
    w_diff = jnp.pad(w_diff, pad).astype(compute_dtype)
    w_delta = jnp.pad(w_delta, pad).astype(compute_dtype)
    return w_diff, w_delta, e


# --------------------------------------------------------------------------- #
# Host-side graph bookkeeping: builds kernel inputs directly at padded size,
# already in the compute dtype (no per-call XLA pad/astype passes).
# --------------------------------------------------------------------------- #
def build_intra_agg_batch(nodes, to_neighs_list, features_cd, *, tb, tu):
    """features_cd: node-feature table already stored in the compute dtype.
    Returns (mask01 [b_pad,u_pad], inv_count [b_pad,1] f32,
             embed [u_pad,F], self_feats [b_pad,F], b, u)."""
    dtype = features_cd.dtype
    samp_neighs = [set(x) for x in to_neighs_list]
    unique_nodes_list = list(set.union(*samp_neighs))
    unique_nodes = {n: i for i, n in enumerate(unique_nodes_list)}
    b = len(samp_neighs)
    u = len(unique_nodes_list)
    f = features_cd.shape[1]
    b_pad = _round_up(b, tb)
    u_pad = _round_up(u, tu)

    # Unnormalized 0/1 mask (exact in bf16); 1/num_neigh applied in the kernel
    # epilogue.  max(count,1) guard preserved for isolated nodes.
    mask01 = np.zeros((b_pad, u_pad), dtype=dtype)
    inv_count = np.ones((b_pad, 1), dtype=np.float32)
    for i, sn in enumerate(samp_neighs):
        cols = [unique_nodes[n] for n in sn]
        mask01[i, cols] = 1
        inv_count[i, 0] = 1.0 / max(len(cols), 1)

    embed = np.zeros((u_pad, f), dtype=dtype)
    embed[:u] = features_cd[np.asarray(unique_nodes_list, dtype=np.int64)]
    self_feats = np.zeros((b_pad, f), dtype=dtype)
    self_feats[:b] = features_cd[np.asarray(nodes, dtype=np.int64)]
    return mask01, inv_count, embed, self_feats, b, u


# --------------------------------------------------------------------------- #
# Forward wrapper
# --------------------------------------------------------------------------- #
def intra_agg_pallas(mask01, inv_count, embed, self_feats, w_diff, w_delta,
                     b, e_out, *, tb, tu, vmem_cap_bytes=None,
                     invariant_buffer_count=None):
    """All array inputs are pre-padded / pre-cast:
      mask01:[b_pad,u_pad] 0/1 compute dtype, inv_count:[b_pad,1] f32,
      embed:[u_pad,F], self_feats:[b_pad,F], w_*:[F,E_pad].
    Returns relu(concat([self-agg, agg], 1) @ W) : [b, e_out] float32."""
    b_pad, u_pad = mask01.shape
    u_e, f = embed.shape
    f_w, e_pad = w_diff.shape
    assert u_e == u_pad and self_feats.shape == (b_pad, f)
    assert inv_count.shape == (b_pad, 1)
    assert f_w == f and w_delta.shape == (f, e_pad) and e_pad % LANE == 0
    assert b_pad % tb == 0 and u_pad % tu == 0

    if vmem_cap_bytes is None:
        vmem_cap_bytes = _tpu_defaults()[0]

    grid = (b_pad // tb, u_pad // tu)
    itemsize = embed.dtype.itemsize
    mask_item = mask01.dtype.itemsize

    # Grid-invariant (or k-invariant) operands; double-buffering them is pure
    # VMEM waste.  pl.Buffered(1) is opt-in (most valuable on v7x's 64 MiB).
    # TODO(synk): enable invariant_buffer_count=1 by default on v7x once the
    # deployment fleet is confirmed to support single-buffered pipeline_mode.
    def inv_spec(shape, index_map):
        if invariant_buffer_count is None:
            return pl.BlockSpec(shape, index_map)
        return pl.BlockSpec(shape, index_map,
                            pipeline_mode=pl.Buffered(invariant_buffer_count))

    buf_inv = 2 if invariant_buffer_count is None else invariant_buffer_count
    vmem_live = (2 * tb * tu * mask_item            # streamed mask tiles
                 + 2 * tu * f * itemsize            # streamed embed tiles
                 + buf_inv * tb * f * itemsize      # self_feats (k-invariant)
                 + buf_inv * 2 * f * e_pad * itemsize   # W_diff + W_delta
                 + buf_inv * tb * 4                 # inv_count
                 + 2 * tb * e_pad * 4               # output tile
                 + tb * f * 4)                      # agg accumulator scratch
    vmem_limit = int(min(max(int(1.5 * vmem_live), 16 << 20), vmem_cap_bytes))

    cost = pl.CostEstimate(
        flops=2 * b_pad * u_pad * f + 4 * b_pad * f * e_pad,
        transcendentals=0,
        bytes_accessed=int(
            mask01.size * mask_item                  # mask streamed once
            + grid[0] * embed.size * itemsize        # embed re-streamed per B tile
            + self_feats.size * itemsize             # self fetched once
            + (w_diff.size + w_delta.size) * itemsize  # weights fetched once
            + inv_count.size * 4
            + b_pad * e_pad * 4),                    # output writeback
    )

    out_padded = pl.pallas_call(
        intra_agg_kernel,
        out_shape=jax.ShapeDtypeStruct((b_pad, e_pad), jnp.float32),
        grid_spec=pltpu.PrefetchScalarGridSpec(
            num_scalar_prefetch=0,
            grid=grid,
            in_specs=[
                pl.BlockSpec((tb, tu), lambda i, k: (i, k)),    # mask01 (streamed)
                pl.BlockSpec((tu, f), lambda i, k: (k, 0)),     # embed  (streamed)
                inv_spec((tb, f), lambda i, k: (i, 0)),         # self_feats
                inv_spec((f, e_pad), lambda i, k: (0, 0)),      # W_diff
                inv_spec((f, e_pad), lambda i, k: (0, 0)),      # W_delta
                inv_spec((tb, 1), lambda i, k: (i, 0)),         # 1/num_neigh
            ],
            out_specs=pl.BlockSpec((tb, e_pad), lambda i, k: (i, 0)),
            scratch_shapes=[
                pltpu.VMEM((tb, f), jnp.float32),               # agg accumulator
            ],
        ),
        compiler_params=pltpu.CompilerParams(
            dimension_semantics=("parallel", "arbitrary"),
            vmem_limit_bytes=vmem_limit,
        ),
        cost_estimate=cost,
    )(mask01, embed, self_feats, w_diff, w_delta, inv_count)

    return out_padded[:b, :e_out]


# --------------------------------------------------------------------------- #
# Demo / correctness check
# --------------------------------------------------------------------------- #
if __name__ == "__main__":
    num_nodes_total = 64
    feat_dim = 32
    embed_dim = 16
    batch = 8

    key = jax.random.PRNGKey(0)
    k_feat, k_w = jax.random.split(key)

    # node feature table (the `features` embedding in PyTorch)
    features_np = np.asarray(
        jax.random.normal(k_feat, (num_nodes_total, feat_dim), dtype=jnp.float32))

    # xavier_uniform_ init for weight [2*feat_dim, embed_dim]
    bound = math.sqrt(6.0 / (2 * feat_dim + embed_dim))
    weight = jax.random.uniform(
        k_w, (2 * feat_dim, embed_dim), dtype=jnp.float32,
        minval=-bound, maxval=bound)

    # deterministic batch nodes + neighbor lists
    random.seed(0)
    nodes = list(range(batch))
    to_neighs_list = [
        random.sample(range(num_nodes_total), random.randint(3, 7)) for _ in nodes
    ]

    # --- pure-JAX reference (exact semantics of the PyTorch forward) ----------
    samp_neighs = [set(x) for x in to_neighs_list]
    unique_nodes_list = list(set.union(*samp_neighs))
    unique_nodes = {n: i for i, n in enumerate(unique_nodes_list)}
    u_unique = len(unique_nodes_list)
    mask_np = np.zeros((batch, u_unique), dtype=np.float32)
    for i, sn in enumerate(samp_neighs):
        for n in sn:
            mask_np[i, unique_nodes[n]] = 1.0
    mask_norm = mask_np / np.maximum(mask_np.sum(1, keepdims=True), 1.0)
    embed_np = features_np[np.asarray(unique_nodes_list, dtype=np.int64)]
    self_np = features_np[np.asarray(nodes, dtype=np.int64)]
    agg_ref = jnp.asarray(mask_norm) @ jnp.asarray(embed_np)
    cat_ref = jnp.concatenate([jnp.asarray(self_np) - agg_ref, agg_ref], axis=1)
    to_feats_ref = np.asarray(jax.nn.relu(cat_ref @ weight))

    # --- tile / generation selection (once per deployment, not per call) ------
    vmem_cap, tb_max, tu_max, two_tc = _tpu_defaults()
    tb, tu, _, _ = choose_tiles(batch, u_unique, tb_max=tb_max, tu_max=tu_max,
                                prefer_two_b_blocks=two_tc)

    # --- f32 path: exact semantics, tight check --------------------------------
    w_diff32, w_delta32, e_out = prepare_intra_agg_weights(weight, jnp.float32)
    m01, invc, emb, slf, b, _ = build_intra_agg_batch(
        nodes, to_neighs_list, features_np, tb=tb, tu=tu)
    out_f32 = intra_agg_pallas(
        jnp.asarray(m01), jnp.asarray(invc), jnp.asarray(emb), jnp.asarray(slf),
        w_diff32, w_delta32, b, e_out, tb=tb, tu=tu, vmem_cap_bytes=vmem_cap)
    out_f32 = jax.block_until_ready(out_f32)
    np.testing.assert_allclose(np.asarray(out_f32), to_feats_ref,
                               rtol=1e-5, atol=1e-5)

    # --- bf16 streamed path (0/1 mask + embed + self + weights in bf16,
    #     f32 MXU accumulation, f32 agg into the epilogue matmul) --------------
    w_diff16, w_delta16, _ = prepare_intra_agg_weights(weight, jnp.bfloat16)
    features_bf16 = features_np.astype(jnp.bfloat16)   # stored once in compute dtype
    m01b, invb, embb, slfb, _, _ = build_intra_agg_batch(
        nodes, to_neighs_list, features_bf16, tb=tb, tu=tu)
    out_bf16 = intra_agg_pallas(
        jnp.asarray(m01b), jnp.asarray(invb), jnp.asarray(embb), jnp.asarray(slfb),
        w_diff16, w_delta16, b, e_out, tb=tb, tu=tu, vmem_cap_bytes=vmem_cap)
    out_bf16 = jax.block_until_ready(out_bf16)
    np.testing.assert_allclose(np.asarray(out_bf16), to_feats_ref,
                               rtol=1e-1, atol=1e-1)

    print("KERNEL_OK")
</pallas_src>

<mosaic_0001>
module attributes {stable_mosaic.version = 11 : i64} {
  func.func @intra_agg_kernel(%arg0: i32, %arg1: i32, %arg2: memref<8x128xf32, #tpu.memory_space<vmem>>, %arg3: memref<128x32xf32, #tpu.memory_space<vmem>>, %arg4: memref<8x32xf32, #tpu.memory_space<vmem>>, %arg5: memref<32x128xf32, #tpu.memory_space<vmem>>, %arg6: memref<32x128xf32, #tpu.memory_space<vmem>>, %arg7: memref<8x1xf32, #tpu.memory_space<vmem>>, %arg8: memref<8x128xf32, #tpu.memory_space<vmem>>, %arg9: memref<8x32xf32, #tpu.memory_space<vmem>>) attributes {dimension_semantics = [#tpu.dimension_semantics<parallel>, #tpu.dimension_semantics<arbitrary>], iteration_bounds = array<i64: 1, 1>, scalar_prefetch = 0 : i64, scratch_operands = 1 : i64, tpu.core_type = #tpu.core_type<tc>, window_params = [{transform_indices = @transform_0, window_bounds = array<i64: 8, 128>}, {transform_indices = @transform_1, window_bounds = array<i64: 128, 32>}, {transform_indices = @transform_2, window_bounds = array<i64: 8, 32>}, {pipeline_mode = #tpu.pipeline_mode<synchronous>, transform_indices = @transform_3, window_bounds = array<i64: 32, 128>}, {pipeline_mode = #tpu.pipeline_mode<synchronous>, transform_indices = @transform_4, window_bounds = array<i64: 32, 128>}, {transform_indices = @transform_5, window_bounds = array<i64: 8, 1>}, {transform_indices = @transform_6, window_bounds = array<i64: 8, 128>}]} {
    %c0_i32 = arith.constant 0 : i32
    %0 = arith.cmpi eq, %arg1, %c0_i32 : i32
    %1 = arith.extui %0 : i1 to i32
    %c0_i32_0 = arith.constant 0 : i32
    %2 = arith.cmpi ne, %1, %c0_i32_0 : i32
    scf.if %2 {
      %cst_10 = arith.constant 0.000000e+00 : f32
      %12 = vector.broadcast %cst_10 : f32 to vector<8x32xf32>
      %c0_11 = arith.constant 0 : index
      %c0_12 = arith.constant 0 : index
      %13 = vector.load %arg9[%c0_11, %c0_12] : memref<8x32xf32, #tpu.memory_space<vmem>>, vector<8x32xf32>
      tpu.vector_store %arg9[%c0_11, %c0_12], %12 {strides = array<i32>} : memref<8x32xf32, #tpu.memory_space<vmem>>, vector<8x32xf32>,
      %c0_13 = arith.constant 0 : index
      %c0_14 = arith.constant 0 : index
      %14 = vector.load %arg4[%c0_13, %c0_14] : memref<8x32xf32, #tpu.memory_space<vmem>>, vector<8x32xf32>
      %c0_15 = arith.constant 0 : index
      %c0_16 = arith.constant 0 : index
      %15 = vector.load %arg5[%c0_15, %c0_16] : memref<32x128xf32, #tpu.memory_space<vmem>>, vector<32x128xf32>
      %cst_17 = arith.constant dense<0.000000e+00> : vector<8x128xf32>
      %16 = tpu.matmul %14, %15, %cst_17 {dimension_numbers = #tpu.dot_dimension_numbers<[1], [0], [0], [1], [0, 0, 1, 1], [], []>} : vector<8x32xf32>, vector<32x128xf32>, vector<8x128xf32> -> vector<8x128xf32>
      %c0_18 = arith.constant 0 : index
      %c0_19 = arith.constant 0 : index
      %17 = vector.load %arg8[%c0_18, %c0_19] : memref<8x128xf32, #tpu.memory_space<vmem>>, vector<8x128xf32>
      tpu.vector_store %arg8[%c0_18, %c0_19], %16 {strides = array<i32>} : memref<8x128xf32, #tpu.memory_space<vmem>>, vector<8x128xf32>,
    } else {
    }
    %c0 = arith.constant 0 : index
    %c0_1 = arith.constant 0 : index
    %3 = vector.load %arg9[%c0, %c0_1] : memref<8x32xf32, #tpu.memory_space<vmem>>, vector<8x32xf32>
    %c0_2 = arith.constant 0 : index
    %c0_3 = arith.constant 0 : index
    %4 = vector.load %arg2[%c0_2, %c0_3] : memref<8x128xf32, #tpu.memory_space<vmem>>, vector<8x128xf32>
    %c0_4 = arith.constant 0 : index
    %c0_5 = arith.constant 0 : index
    %5 = vector.load %arg3[%c0_4, %c0_5] : memref<128x32xf32, #tpu.memory_space<vmem>>, vector<128x32xf32>
    %cst = arith.constant dense<0.000000e+00> : vector<8x32xf32>
    %6 = tpu.matmul %4, %5, %cst {dimension_numbers = #tpu.dot_dimension_numbers<[1], [0], [0], [1], [0, 0, 1, 1], [], []>} : vector<8x128xf32>, vector<128x32xf32>, vector<8x32xf32> -> vector<8x32xf32>
    %7 = arith.addf %3, %6 : vector<8x32xf32>
    %c0_6 = arith.constant 0 : index
    %c0_7 = arith.constant 0 : index
    %8 = vector.load %arg9[%c0_6, %c0_7] : memref<8x32xf32, #tpu.memory_space<vmem>>, vector<8x32xf32>
    tpu.vector_store %arg9[%c0_6, %c0_7], %7 {strides = array<i32>} : memref<8x32xf32, #tpu.memory_space<vmem>>, vector<8x32xf32>,
    %c0_i32_8 = arith.constant 0 : i32
    %9 = arith.cmpi eq, %arg1, %c0_i32_8 : i32
    %10 = arith.extui %9 : i1 to i32
    %c0_i32_9 = arith.constant 0 : i32
    %11 = arith.cmpi ne, %10, %c0_i32_9 : i32
    scf.if %11 {
      %c0_10 = arith.constant 0 : index
      %c0_11 = arith.constant 0 : index
      %12 = vector.load %arg9[%c0_10, %c0_11] : memref<8x32xf32, #tpu.memory_space<vmem>>, vector<8x32xf32>
      %c0_12 = arith.constant 0 : index
      %c0_13 = arith.constant 0 : index
      %13 = vector.load %arg7[%c0_12, %c0_13] : memref<8x1xf32, #tpu.memory_space<vmem>>, vector<8x1xf32>
      %14 = vector.broadcast %13 : vector<8x1xf32> to vector<8x32xf32>
      %15 = arith.mulf %12, %14 : vector<8x32xf32>
      %c0_14 = arith.constant 0 : index
      %c0_15 = arith.constant 0 : index
      %16 = vector.load %arg8[%c0_14, %c0_15] : memref<8x128xf32, #tpu.memory_space<vmem>>, vector<8x128xf32>
      %c0_16 = arith.constant 0 : index
      %c0_17 = arith.constant 0 : index
      %17 = vector.load %arg6[%c0_16, %c0_17] : memref<32x128xf32, #tpu.memory_space<vmem>>, vector<32x128xf32>
      %cst_18 = arith.constant dense<0.000000e+00> : vector<8x128xf32>
      %18 = tpu.matmul %15, %17, %cst_18 {dimension_numbers = #tpu.dot_dimension_numbers<[1], [0], [0], [1], [0, 0, 1, 1], [], []>} : vector<8x32xf32>, vector<32x128xf32>, vector<8x128xf32> -> vector<8x128xf32>
      %19 = arith.addf %16, %18 : vector<8x128xf32>
      %cst_19 = arith.constant 0.000000e+00 : f32
      %20 = vector.broadcast %cst_19 : f32 to vector<8x128xf32>
      %21 = arith.maximumf %19, %20 : vector<8x128xf32>
      %c0_20 = arith.constant 0 : index
      %c0_21 = arith.constant 0 : index
      %22 = vector.load %arg8[%c0_20, %c0_21] : memref<8x128xf32, #tpu.memory_space<vmem>>, vector<8x128xf32>
      tpu.vector_store %arg8[%c0_20, %c0_21], %21 {strides = array<i32>} : memref<8x128xf32, #tpu.memory_space<vmem>>, vector<8x128xf32>,
    } else {
    }
    return
  }
  func.func @transform_0(%arg0: i32, %arg1: i32) -> (i32, i32) {
    %c0_i32 = arith.constant 0 : i32
    return %arg0, %arg1 : i32, i32
  }
  func.func @transform_1(%arg0: i32, %arg1: i32) -> (i32, i32) {
    %c0_i32 = arith.constant 0 : i32
    %c0_i32_0 = arith.constant 0 : i32
    return %arg1, %c0_i32 : i32, i32
  }
  func.func @transform_2(%arg0: i32, %arg1: i32) -> (i32, i32) {
    %c0_i32 = arith.constant 0 : i32
    %c0_i32_0 = arith.constant 0 : i32
    return %arg0, %c0_i32 : i32, i32
  }
  func.func @transform_3(%arg0: i32, %arg1: i32) -> (i32, i32) {
    %c0_i32 = arith.constant 0 : i32
    %c0_i32_0 = arith.constant 0 : i32
    %c0_i32_1 = arith.constant 0 : i32
    return %c0_i32, %c0_i32_0 : i32, i32
  }
  func.func @transform_4(%arg0: i32, %arg1: i32) -> (i32, i32) {
    %c0_i32 = arith.constant 0 : i32
    %c0_i32_0 = arith.constant 0 : i32
    %c0_i32_1 = arith.constant 0 : i32
    return %c0_i32, %c0_i32_0 : i32, i32
  }
  func.func @transform_5(%arg0: i32, %arg1: i32) -> (i32, i32) {
    %c0_i32 = arith.constant 0 : i32
    %c0_i32_0 = arith.constant 0 : i32
    return %arg0, %c0_i32 : i32, i32
  }
  func.func @transform_6(%arg0: i32, %arg1: i32) -> (i32, i32) {
    %c0_i32 = arith.constant 0 : i32
    %c0_i32_0 = arith.constant 0 : i32
    return %arg0, %c0_i32 : i32, i32
  }
}

</mosaic_0001>

<llo_original>
// kernel: tpu_custom_call.1
$region0: #{tpu_custom_call.1}
  #allocation0 [shape = 'u32[]', space=smem, size = 0x4, offset = 0x4, fixed_abs, tag = 'smem constant byte address 0x4 - core index']
  #allocation1 [shape = 'u32[144,128]{1,0:T(1,128)}', space=vmem, size = 0x12000, scoped, tag = 'internal scratch']
  #allocation2 [shape = 'f32[8,32]{1,0:T(8,128)}', space=vmem, size = 0x1000, scoped, tag = 'scratch operand']
  %s0 = inlined_call_operand.vmem [shape: f32[8,128], index: 0, kind: input, shape index: {}]
  %s1 = inlined_call_operand.vmem [shape: f32[128,32], index: 1, kind: input, shape index: {}]
  %s2 = inlined_call_operand.vmem [shape: f32[8,32], index: 2, kind: input, shape index: {}]
  %s3 = inlined_call_operand.vmem [shape: f32[32,128], index: 3, kind: input, shape index: {}]
  %s4 = inlined_call_operand.vmem [shape: f32[32,128], index: 4, kind: input, shape index: {}]
  %s5 = inlined_call_operand.vmem [shape: f32[8,1], index: 5, kind: input, shape index: {}]
  %s6 = inlined_call_operand.hbm [shape: f32[8,128], index: 6, kind: output, shape index: {}]
  %s7 = sld [smem:[#allocation0]]
  $region42: #{tpu_custom_call.1} parent=0
    _
  %s9 = ssub.s32 1, %s7
  %s10 = scalar_select 0, %s9, %s7
  $region1: #{tpu_custom_call.1} parent=0
    #allocation3 [shape = 'u8[4096]{0}', space=vmem, size = 0x1000, scoped, tag = 'output window, operand 0, single buffered']
    #allocation4 [shape = 's32[1]{0}', space=sflag, size = 0x4, scoped, tag = 'scoped memory for tpu_custom_call.1']
    %11 = vsyncpa [#allocation4], 0
    // Predicated region
    $region2: #{tpu_custom_call.1} parent=1 // pred_check
      _
    $region3: #{tpu_custom_call.1} parent=1 // pred_check_branch
      %13 = sbr.rel (0) target = $region5
    $region4: #{tpu_custom_call.1} parent=1 // pred_region
      _
    $region5: #{tpu_custom_call.1} parent=1 // pred_fallthru
      _
    // Predicated region
    $region6: #{tpu_custom_call.1} parent=1 // pred_check
      _
    $region7: #{tpu_custom_call.1} parent=1 // pred_check_branch
      %15 = sbr.rel (0) target = $region9
    $region8: #{tpu_custom_call.1} parent=1 // pred_region
      _
    $region9: #{tpu_custom_call.1} parent=1 // pred_fallthru
      _
    // Predicated region
    $region10: #{tpu_custom_call.1} parent=1 // pred_check
      _
    $region11: #{tpu_custom_call.1} parent=1 // pred_check_branch
      %17 = sbr.rel (0) target = $region13
    $region12: #{tpu_custom_call.1} parent=1 // pred_region
      _
    $region13: #{tpu_custom_call.1} parent=1 // pred_fallthru
      _
    // Predicated region
    $region14: #{tpu_custom_call.1} parent=1 // pred_check
      _
    $region15: #{tpu_custom_call.1} parent=1 // pred_check_branch
      %19 = sbr.rel (0) target = $region17
    $region16: #{tpu_custom_call.1} parent=1 // pred_region
      _
    $region17: #{tpu_custom_call.1} parent=1 // pred_fallthru
      _
    // Predicated region
    $region18: #{tpu_custom_call.1} parent=1 // pred_check
      _
    $region19: #{tpu_custom_call.1} parent=1 // pred_check_branch
      %21 = sbr.rel (0) target = $region21
    $region20: #{tpu_custom_call.1} parent=1 // pred_region
      _
    $region21: #{tpu_custom_call.1} parent=1 // pred_fallthru
      _
    // Predicated region
    $region22: #{tpu_custom_call.1} parent=1 // pred_check
      _
    $region23: #{tpu_custom_call.1} parent=1 // pred_check_branch
      %23 = sbr.rel (0) target = $region25
    $region24: #{tpu_custom_call.1} parent=1 // pred_region
      _
    $region25: #{tpu_custom_call.1} parent=1 // pred_fallthru
      _
    %p24 = scmp.eq.s32.totalorder 0, 0
    // Predicated region
    $region26: #{tpu_custom_call.1} parent=1 // pred_check
      %p25 = pneg %p24
    $region27: #{tpu_custom_call.1} parent=1 // pred_check_branch
      %27 = sbr.rel (%p25) target = $region29
    $region28: #{tpu_custom_call.1} parent=1 // pred_region
      %vm28 = vcmask 261120
      %29 = vst.msk [vmem:[#allocation2] sm:$0xff] %vm28, 0.0
      %v30 = vld [vmem:[%s2] sm:$0xff]
      %v31 = vld [vmem:[%s3] sm:$0xff]
      %v32 = vld [vmem:[%s3 + $0x8] sm:$0xff]
      %v33 = vld [vmem:[%s3 + $0x10] sm:$0xff]
      %v34 = vld [vmem:[%s3 + $0x18] sm:$0xff]
      %v36 = vsel %vm28, %v30, 0
      %38 = vmatprep.subr.mxu0 0.0
      %39 = vmatpush1.msra.mxu0 %v31
      %40 = vmatprep.subr.mxu0 0.0
      %41 = vmatpush1.msra.mxu0 %v32
      %42 = vmatprep.subr.mxu0 0.0
      %43 = vmatpush1.msra.mxu0 %v33
      %44 = vmatprep.subr.mxu0 0.0
      %45 = vmatpush1.msra.mxu0 %v34
      %46 = vmatprep.subr.mxu0 0.0
      %47 = vmatpush1.msra.mxu0 0.0
      %48 = vmatprep.subr.mxu0 0.0
      %49 = vmatpush1.msra.mxu0 0.0
      %50 = vmatprep.subr.mxu0 0.0
      %51 = vmatpush1.msra.mxu0 0.0
      %52 = vmatprep.subr.mxu0 0.0
      %53 = vmatpush1.msra.mxu0 0.0
      %54 = vmatprep.subr.mxu0 0.0
      %55 = vmatpush1.msra.mxu0 0.0
      %56 = vmatprep.subr.mxu0 0.0
      %57 = vmatpush1.msra.mxu0 0.0
      %58 = vmatprep.subr.mxu0 0.0
      %59 = vmatpush1.msra.mxu0 0.0
      %60 = vmatprep.subr.mxu0 0.0
      %61 = vmatpush1.msra.mxu0 0.0
      %62 = vmatprep.subr.mxu0 0.0
      %63 = vmatpush1.msra.mxu0 0.0
      %64 = vmatprep.subr.mxu0 0.0
      %65 = vmatpush1.msra.mxu0 0.0
      %66 = vmatprep.subr.mxu0 0.0
      %67 = vmatpush1.msra.mxu0 0.0
      %68 = vmatprep.subr.mxu0 0.0
      %69 = vmatpush1.msra.mxu0 0.0
      %70 = vmatprep.subr.mxu0 0.0
      %71 = vmatpush1.msra.mxu0 0.0
      %72 = vmatprep.subr.mxu0 0.0
      %73 = vmatpush1.msra.mxu0 0.0
      %74 = vmatprep.subr.mxu0 0.0
      %75 = vmatpush1.msra.mxu0 0.0
      %76 = vmatprep.subr.mxu0 0.0
      %77 = vmatpush1.msra.mxu0 0.0
      %78 = vmatprep.subr.mxu0 0.0
      %79 = vmatpush1.msra.mxu0 0.0
      %80 = vmatprep.subr.mxu0 0.0
      %81 = vmatpush1.msra.mxu0 0.0
      %82 = vmatprep.subr.mxu0 0.0
      %83 = vmatpush1.msra.mxu0 0.0
      %84 = vmatprep.subr.mxu0 0.0
      %85 = vmatpush1.msra.mxu0 0.0
      %86 = vmatprep.subr.mxu0 0.0
      %87 = vmatpush1.msra.mxu0 0.0
      %88 = vmatprep.subr.mxu0 0.0
      %89 = vmatpush1.msra.mxu0 0.0
      %90 = vmatprep.subr.mxu0 0.0
      %91 = vmatpush1.msra.mxu0 0.0
      %92 = vmatprep.subr.mxu0 0.0
      %93 = vmatpush1.msra.mxu0 0.0
      %94 = vmatprep.subr.mxu0 0.0
      %95 = vmatpush1.msra.mxu0 0.0
      %96 = vmatprep.subr.mxu0 0.0
      %97 = vmatpush1.msra.mxu0 0.0
      %98 = vmatprep.subr.mxu0 0.0
      %99 = vmatpush1.msra.mxu0 0.0
      %100 = vmatprep.subr.mxu0 0.0
      %101 = vmatpush1.msra.mxu0 0.0
      %102 = vmatprep.mubr.f32.mxu0 0.0
      %103 = vmatmul.mubr.f32.gmra.mrb[0].mxu0 %v36
      %v104 = vpop.f32.mrb[0].mxu0
      %v105 = vadd.f32 0.0, %v104
      %v106 = vpop.f32.mrb[0].mxu0
      %107 = vdwg.mxu0
      %108 = vst [vmem:[#allocation3] sm:$0xff] %v105
    $region29: #{tpu_custom_call.1} parent=1 // pred_fallthru
      _
    %v109 = vld [vmem:[#allocation2] sm:$0xff]
    %v110 = vld [vmem:[%s0] sm:$0xff]
    %v111 = vld [vmem:[%s1] sm:$0xff]
    %v112 = vld [vmem:[%s1 + $0x8] sm:$0xff]
    %v113 = vld [vmem:[%s1 + $0x10] sm:$0xff]
    %v114 = vld [vmem:[%s1 + $0x18] sm:$0xff]
    %v115 = vld [vmem:[%s1 + $0x20] sm:$0xff]
    %v116 = vld [vmem:[%s1 + $0x28] sm:$0xff]
    %v117 = vld [vmem:[%s1 + $0x30] sm:$0xff]
    %v118 = vld [vmem:[%s1 + $0x38] sm:$0xff]
    %v119 = vld [vmem:[%s1 + $0x40] sm:$0xff]
    %v120 = vld [vmem:[%s1 + $0x48] sm:$0xff]
    %v121 = vld [vmem:[%s1 + $0x50] sm:$0xff]
    %v122 = vld [vmem:[%s1 + $0x58] sm:$0xff]
    %v123 = vld [vmem:[%s1 + $0x60] sm:$0xff]
    %v124 = vld [vmem:[%s1 + $0x68] sm:$0xff]
    %v125 = vld [vmem:[%s1 + $0x70] sm:$0xff]
    %v126 = vld [vmem:[%s1 + $0x78] sm:$0xff]
    %127 = vmatprep.subr.mxu0 0.0
    %128 = vmatpush1.msra.mxu0 %v111
    %129 = vmatprep.subr.mxu0 0.0
    %130 = vmatpush1.msra.mxu0 %v112
    %131 = vmatprep.subr.mxu0 0.0
    %132 = vmatpush1.msra.mxu0 %v113
    %133 = vmatprep.subr.mxu0 0.0
    %134 = vmatpush1.msra.mxu0 %v114
    %135 = vmatprep.subr.mxu0 0.0
    %136 = vmatpush1.msra.mxu0 %v115
    %137 = vmatprep.subr.mxu0 0.0
    %138 = vmatpush1.msra.mxu0 %v116
    %139 = vmatprep.subr.mxu0 0.0
    %140 = vmatpush1.msra.mxu0 %v117
    %141 = vmatprep.subr.mxu0 0.0
    %142 = vmatpush1.msra.mxu0 %v118
    %143 = vmatprep.subr.mxu0 0.0
    %144 = vmatpush1.msra.mxu0 %v119
    %145 = vmatprep.subr.mxu0 0.0
    %146 = vmatpush1.msra.mxu0 %v120
    %147 = vmatprep.subr.mxu0 0.0
    %148 = vmatpush1.msra.mxu0 %v121
    %149 = vmatprep.subr.mxu0 0.0
    %150 = vmatpush1.msra.mxu0 %v122
    %151 = vmatprep.subr.mxu0 0.0
    %152 = vmatpush1.msra.mxu0 %v123
    %153 = vmatprep.subr.mxu0 0.0
    %154 = vmatpush1.msra.mxu0 %v124
    %155 = vmatprep.subr.mxu0 0.0
    %156 = vmatpush1.msra.mxu0 %v125
    %157 = vmatprep.subr.mxu0 0.0
    %158 = vmatpush1.msra.mxu0 %v126
    %159 = vmatprep.subr.mxu0 0.0
    %160 = vmatpush1.msra.mxu0 0.0
    %161 = vmatprep.subr.mxu0 0.0
    %162 = vmatpush1.msra.mxu0 0.0
    %163 = vmatprep.subr.mxu0 0.0
    %164 = vmatpush1.msra.mxu0 0.0
    %165 = vmatprep.subr.mxu0 0.0
    %166 = vmatpush1.msra.mxu0 0.0
    %167 = vmatprep.subr.mxu0 0.0
    %168 = vmatpush1.msra.mxu0 0.0
    %169 = vmatprep.subr.mxu0 0.0
    %170 = vmatpush1.msra.mxu0 0.0
    %171 = vmatprep.subr.mxu0 0.0
    %172 = vmatpush1.msra.mxu0 0.0
    %173 = vmatprep.subr.mxu0 0.0
    %174 = vmatpush1.msra.mxu0 0.0
    %175 = vmatprep.subr.mxu0 0.0
    %176 = vmatpush1.msra.mxu0 0.0
    %177 = vmatprep.subr.mxu0 0.0
    %178 = vmatpush1.msra.mxu0 0.0
    %179 = vmatprep.subr.mxu0 0.0
    %180 = vmatpush1.msra.mxu0 0.0
    %181 = vmatprep.subr.mxu0 0.0
    %182 = vmatpush1.msra.mxu0 0.0
    %183 = vmatprep.subr.mxu0 0.0
    %184 = vmatpush1.msra.mxu0 0.0
    %185 = vmatprep.subr.mxu0 0.0
    %186 = vmatpush1.msra.mxu0 0.0
    %187 = vmatprep.subr.mxu0 0.0
    %188 = vmatpush1.msra.mxu0 0.0
    %189 = vmatprep.subr.mxu0 0.0
    %190 = vmatpush1.msra.mxu0 0.0
    %191 = vmatprep.mubr.f32.mxu0 0.0
    %192 = vmatmul.mubr.f32.gmra.mrb[0].mxu0 %v110
    %v193 = vpop.f32.mrb[0].mxu0
    %v194 = vadd.f32 0.0, %v193
    %v195 = vpop.f32.mrb[0].mxu0
    %196 = vdwg.mxu0
    %v197 = vadd.f32 %v109, %v194
    %vm198 = vcmask 261120
    %199 = vst.msk [vmem:[#allocation2] sm:$0xff] %vm198, %v197
    // Predicated region
    $region30: #{tpu_custom_call.1} parent=1 // pred_check
      %p200 = pneg %p24
    $region31: #{tpu_custom_call.1} parent=1 // pred_check_branch
      %202 = sbr.rel (%p200) target = $region33
    $region32: #{tpu_custom_call.1} parent=1 // pred_region
      %v203 = vld [vmem:[#allocation2] sm:$0xff]
      %v204 = vld [vmem:[%s5] sm:$0xff]
      %206 = vset.pattern.permute.xlu0 0
      %207 = vperm.xlu0 %206, %v204
      %v208 = vpop.permute.xlu0 %207
      %v210 = vmul.f32 %v203, %v208
      %v211 = vld [vmem:[#allocation3] sm:$0xff]
      %v212 = vld [vmem:[%s4] sm:$0xff]
      %v213 = vld [vmem:[%s4 + $0x8] sm:$0xff]
      %v214 = vld [vmem:[%s4 + $0x10] sm:$0xff]
      %v215 = vld [vmem:[%s4 + $0x18] sm:$0xff]
      %v217 = vsel %vm198, %v210, 0
      %219 = vmatprep.subr.mxu0 0.0
      %220 = vmatpush1.msra.mxu0 %v212
      %221 = vmatprep.subr.mxu0 0.0
      %222 = vmatpush1.msra.mxu0 %v213
      %223 = vmatprep.subr.mxu0 0.0
      %224 = vmatpush1.msra.mxu0 %v214
      %225 = vmatprep.subr.mxu0 0.0
      %226 = vmatpush1.msra.mxu0 %v215
      %227 = vmatprep.subr.mxu0 0.0
      %228 = vmatpush1.msra.mxu0 0.0
      %229 = vmatprep.subr.mxu0 0.0
      %230 = vmatpush1.msra.mxu0 0.0
      %231 = vmatprep.subr.mxu0 0.0
      %232 = vmatpush1.msra.mxu0 0.0
      %233 = vmatprep.subr.mxu0 0.0
      %234 = vmatpush1.msra.mxu0 0.0
      %235 = vmatprep.subr.mxu0 0.0
      %236 = vmatpush1.msra.mxu0 0.0
      %237 = vmatprep.subr.mxu0 0.0
      %238 = vmatpush1.msra.mxu0 0.0
      %239 = vmatprep.subr.mxu0 0.0
      %240 = vmatpush1.msra.mxu0 0.0
      %241 = vmatprep.subr.mxu0 0.0
      %242 = vmatpush1.msra.mxu0 0.0
      %243 = vmatprep.subr.mxu0 0.0
      %244 = vmatpush1.msra.mxu0 0.0
      %245 = vmatprep.subr.mxu0 0.0
      %246 = vmatpush1.msra.mxu0 0.0
      %247 = vmatprep.subr.mxu0 0.0
      %248 = vmatpush1.msra.mxu0 0.0
      %249 = vmatprep.subr.mxu0 0.0
      %250 = vmatpush1.msra.mxu0 0.0
      %251 = vmatprep.subr.mxu0 0.0
      %252 = vmatpush1.msra.mxu0 0.0
      %253 = vmatprep.subr.mxu0 0.0
      %254 = vmatpush1.msra.mxu0 0.0
      %255 = vmatprep.subr.mxu0 0.0
      %256 = vmatpush1.msra.mxu0 0.0
      %257 = vmatprep.subr.mxu0 0.0
      %258 = vmatpush1.msra.mxu0 0.0
      %259 = vmatprep.subr.mxu0 0.0
      %260 = vmatpush1.msra.mxu0 0.0
      %261 = vmatprep.subr.mxu0 0.0
      %262 = vmatpush1.msra.mxu0 0.0
      %263 = vmatprep.subr.mxu0 0.0
      %264 = vmatpush1.msra.mxu0 0.0
      %265 = vmatprep.subr.mxu0 0.0
      %266 = vmatpush1.msra.mxu0 0.0
      %267 = vmatprep.subr.mxu0 0.0
      %268 = vmatpush1.msra.mxu0 0.0
      %269 = vmatprep.subr.mxu0 0.0
      %270 = vmatpush1.msra.mxu0 0.0
      %271 = vmatprep.subr.mxu0 0.0
      %272 = vmatpush1.msra.mxu0 0.0
      %273 = vmatprep.subr.mxu0 0.0
      %274 = vmatpush1.msra.mxu0 0.0
      %275 = vmatprep.subr.mxu0 0.0
      %276 = vmatpush1.msra.mxu0 0.0
      %277 = vmatprep.subr.mxu0 0.0
      %278 = vmatpush1.msra.mxu0 0.0
      %279 = vmatprep.subr.mxu0 0.0
      %280 = vmatpush1.msra.mxu0 0.0
      %281 = vmatprep.subr.mxu0 0.0
      %282 = vmatpush1.msra.mxu0 0.0
      %283 = vmatprep.mubr.f32.mxu0 0.0
      %284 = vmatmul.mubr.f32.gmra.mrb[0].mxu0 %v217
      %v285 = vpop.f32.mrb[0].mxu0
      %v286 = vadd.f32 0.0, %v285
      %v287 = vpop.f32.mrb[0].mxu0
      %288 = vdwg.mxu0
      %v289 = vadd.f32 %v211, %v286
      %v290 = vmax.f32 %v289, 0.0
      %291 = vst [vmem:[#allocation3] sm:$0xff] %v290
    $region33: #{tpu_custom_call.1} parent=1 // pred_fallthru
      _
    // Predicated region
    $region34: #{tpu_custom_call.1} parent=1 // pred_check
      _
    $region35: #{tpu_custom_call.1} parent=1 // pred_check_branch
      %293 = sbr.rel (0) target = $region37
    $region36: #{tpu_custom_call.1} parent=1 // pred_region
      %s295 = ssub.s32 128, 128
      %296 = vsyncadd [#allocation4], %s295
      %s298 = sshll.u32 [#allocation3], 4
      %s299 = int_to_ptr.vmem [resolvable:$true] %s298
      %301 = dma.vmem_to_hbm [thread:$0]  %s299, 128, %s6, [#allocation4]
    $region37: #{tpu_custom_call.1} parent=1 // pred_fallthru
      _
    // Predicated region
    $region38: #{tpu_custom_call.1} parent=1 // pred_check
      _
    $region39: #{tpu_custom_call.1} parent=1 // pred_check_branch
      %303 = sbr.rel (0) target = $region41
    $region40: #{tpu_custom_call.1} parent=1 // pred_region
      %304 = dma.done [#allocation4], 128
    $region41: #{tpu_custom_call.1} parent=1 // pred_fallthru
      _
    %305 = vsyncpa [#allocation4], 1

</llo_original>
